<compile_context>
chip_gen: v7x
topology: tpu7x:2x2x1
jax: 0.10.0
libtpu: 0.0.40
codegen_flags: <defaults>
</compile_context>

<pallas_src>
import jax
import jax.numpy as jnp
from jax.experimental import pallas as pl
from jax.experimental.pallas import tpu as pltpu


def _attention_kernel(x_q_ref, x_kv_ref, wq_ref, bq_ref, wk_ref, bk_ref,
                      wv_ref, bv_ref, wo_ref, bo_ref, o_ref):
    h = pl.program_id(2)

    xq = x_q_ref[0]    # (Tq, E) bf16
    xkv = x_kv_ref[0]  # (S,  E) bf16

    # Per-head projections: bf16 MXU operands, f32 accumulation.
    # 1/sqrt(head_dim) is pre-folded into wq/bq by the wrapper.
    q = jnp.dot(xq, wq_ref[0], preferred_element_type=jnp.float32) + bq_ref[0]
    k = jnp.dot(xkv, wk_ref[0], preferred_element_type=jnp.float32) + bk_ref[0]
    v = jnp.dot(xkv, wv_ref[0], preferred_element_type=jnp.float32) + bv_ref[0]

    # Scores + numerically stable softmax (f32), denom via EUP approx recip.
    s = jnp.dot(q.astype(jnp.bfloat16), k.astype(jnp.bfloat16).T,
                preferred_element_type=jnp.float32)               # (Tq, S)
    s = s - jnp.max(s, axis=-1, keepdims=True)
    p = jnp.exp(s)
    p = p * pl.reciprocal(jnp.sum(p, axis=-1, keepdims=True), approx=True)

    # PV with bf16 probs (halves vreg footprint, doubles MXU rate).
    ctx = jnp.dot(p.astype(jnp.bfloat16), v.astype(jnp.bfloat16),
                  preferred_element_type=jnp.float32)             # (Tq, hd)

    # This head's contribution to the output projection.
    head_out = jnp.dot(ctx.astype(jnp.bfloat16), wo_ref[0],
                       preferred_element_type=jnp.float32)        # (Tq, E)

    # Accumulate across the head grid axis in the resident output block.
    @pl.when(h == 0)
    def _():
        o_ref[0] = head_out + bo_ref[...]

    @pl.when(h > 0)
    def _():
        o_ref[0] = o_ref[0] + head_out


def attention_pallas(x, params, *, num_heads, q_tile=256):
    """x: (bs, seq_len, embed_dim) float32. Returns float32."""
    bs, seq_len, embed_dim = x.shape
    head_dim = embed_dim // num_heads
    assert head_dim * num_heads == embed_dim

    wq, bq, wk, bk, wv, bv, wo, bo = params
    scale = 1.0 / jnp.sqrt(jnp.float32(head_dim))

    # Per-head weight layouts prepared OUTSIDE the kernel (cheap XLA reshapes):
    #   wq/wk/wv: (E, E) -> (H, E, hd)  (output columns of head h)
    #   wo:       (E, E) -> (H, hd, E)  (input rows of head h)
    # Attention scale folded into the Q projection (exact).
    def split_cols(w):
        return w.reshape(embed_dim, num_heads, head_dim).transpose(1, 0, 2)

    wq_h = (split_cols(wq) * scale).astype(jnp.bfloat16)
    wk_h = split_cols(wk).astype(jnp.bfloat16)
    wv_h = split_cols(wv).astype(jnp.bfloat16)
    wo_h = wo.reshape(num_heads, head_dim, embed_dim).astype(jnp.bfloat16)

    bq_h = (bq.reshape(1, num_heads, head_dim).transpose(1, 0, 2) * scale)
    bk_h = bk.reshape(1, num_heads, head_dim).transpose(1, 0, 2)
    bv_h = bv.reshape(1, num_heads, head_dim).transpose(1, 0, 2)
    # biases stay f32 (added to the f32 accumulators)

    x_bf = x.astype(jnp.bfloat16)  # bf16 MXU operands; accumulate in f32

    tq = min(q_tile, seq_len)
    assert seq_len % tq == 0  # TODO(synk): pad seq_len for non-divisible tiles
    n_qt = seq_len // tq

    grid = (bs, n_qt, num_heads)

    x_q_spec = pl.BlockSpec((1, tq, embed_dim), lambda b, qi, h: (b, qi, 0))
    x_kv_spec = pl.BlockSpec((1, seq_len, embed_dim), lambda b, qi, h: (b, 0, 0))
    wqkv_spec = pl.BlockSpec((1, embed_dim, head_dim), lambda b, qi, h: (h, 0, 0))
    bqkv_spec = pl.BlockSpec((1, 1, head_dim), lambda b, qi, h: (h, 0, 0))
    wo_spec = pl.BlockSpec((1, head_dim, embed_dim), lambda b, qi, h: (h, 0, 0))
    bo_spec = pl.BlockSpec((1, embed_dim), lambda b, qi, h: (0, 0))
    out_spec = pl.BlockSpec((1, tq, embed_dim), lambda b, qi, h: (b, qi, 0))

    return pl.pallas_call(
        _attention_kernel,
        out_shape=jax.ShapeDtypeStruct((bs, seq_len, embed_dim), jnp.float32),
        grid_spec=pltpu.PrefetchScalarGridSpec(
            num_scalar_prefetch=0,
            grid=grid,
            in_specs=[x_q_spec, x_kv_spec,
                      wqkv_spec, bqkv_spec,   # q
                      wqkv_spec, bqkv_spec,   # k
                      wqkv_spec, bqkv_spec,   # v
                      wo_spec, bo_spec],      # out proj
            out_specs=out_spec,
        ),
        compiler_params=pltpu.CompilerParams(
            dimension_semantics=("parallel", "parallel", "arbitrary")),
    )(x_bf, x_bf, wq_h, bq_h, wk_h, bk_h, wv_h, bv_h, wo_h, bo)


def attention_reference(x, params, *, num_heads):
    """Pure-JAX f32 reference mirroring the PyTorch module exactly."""
    bs, seq_len, embed_dim = x.shape
    head_dim = embed_dim // num_heads
    wq, bq, wk, bk, wv, bv, wo, bo = params

    q = x @ wq + bq
    k = x @ wk + bk
    v = x @ wv + bv

    def split_heads(t):  # (bs, S, E) -> (bs, H, S, hd)
        return t.reshape(bs, seq_len, num_heads, head_dim).transpose(0, 2, 1, 3)

    q, k, v = split_heads(q), split_heads(k), split_heads(v)
    scores = jnp.einsum("bhqd,bhkd->bhqk", q, k) / jnp.sqrt(jnp.float32(head_dim))
    attn = jax.nn.softmax(scores, axis=-1)
    ctx = jnp.einsum("bhqk,bhkd->bhqd", attn, v)
    ctx = ctx.transpose(0, 2, 1, 3).reshape(bs, seq_len, embed_dim)
    return ctx @ wo + bo


def init_params(key, embed_dim):
    keys = jax.random.split(key, 8)
    scale = 1.0 / jnp.sqrt(jnp.float32(embed_dim))

    def w(k):
        return (jax.random.uniform(k, (embed_dim, embed_dim), jnp.float32,
                                   -1.0, 1.0) * scale)

    def b(k):
        return (jax.random.uniform(k, (1, embed_dim), jnp.float32,
                                   -1.0, 1.0) * scale)

    return (w(keys[0]), b(keys[1]),   # q
            w(keys[2]), b(keys[3]),   # k
            w(keys[4]), b(keys[5]),   # v
            w(keys[6]), b(keys[7]))   # out


if __name__ == "__main__":
    bs, seq_len, embed_dim, num_heads = 2, 8, 32, 4

    key = jax.random.PRNGKey(0)
    kx, kp = jax.random.split(key)
    x = jax.random.normal(kx, (bs, seq_len, embed_dim), jnp.float32)
    params = init_params(kp, embed_dim)

    out = attention_pallas(x, params, num_heads=num_heads)
    out = jax.block_until_ready(out)

    ref = attention_reference(x, params, num_heads=num_heads)
    assert out.shape == (bs, seq_len, embed_dim)
    # bf16 MXU operands (f32 accumulation) -> looser tolerance than pure f32.
    assert jnp.allclose(out, ref, atol=3e-2, rtol=3e-2), "mismatch vs reference"

    print("KERNEL_OK")
</pallas_src>

<mosaic_0001>
module attributes {stable_mosaic.version = 11 : i64} {
  func.func @_attention_kernel(%arg0: i32, %arg1: i32, %arg2: i32, %arg3: memref<1x8x32xbf16, #tpu.memory_space<vmem>>, %arg4: memref<1x8x32xbf16, #tpu.memory_space<vmem>>, %arg5: memref<1x32x8xbf16, #tpu.memory_space<vmem>>, %arg6: memref<1x1x8xf32, #tpu.memory_space<vmem>>, %arg7: memref<1x32x8xbf16, #tpu.memory_space<vmem>>, %arg8: memref<1x1x8xf32, #tpu.memory_space<vmem>>, %arg9: memref<1x32x8xbf16, #tpu.memory_space<vmem>>, %arg10: memref<1x1x8xf32, #tpu.memory_space<vmem>>, %arg11: memref<1x8x32xbf16, #tpu.memory_space<vmem>>, %arg12: memref<1x32xf32, #tpu.memory_space<vmem>>, %arg13: memref<1x8x32xf32, #tpu.memory_space<vmem>>) attributes {dimension_semantics = [#tpu.dimension_semantics<parallel>, #tpu.dimension_semantics<parallel>, #tpu.dimension_semantics<arbitrary>], iteration_bounds = array<i64: 2, 1, 4>, scalar_prefetch = 0 : i64, scratch_operands = 0 : i64, tpu.core_type = #tpu.core_type<tc>, window_params = [{transform_indices = @transform_0, window_bounds = array<i64: 1, 8, 32>}, {transform_indices = @transform_1, window_bounds = array<i64: 1, 8, 32>}, {transform_indices = @transform_2, window_bounds = array<i64: 1, 32, 8>}, {transform_indices = @transform_3, window_bounds = array<i64: 1, 1, 8>}, {transform_indices = @transform_4, window_bounds = array<i64: 1, 32, 8>}, {transform_indices = @transform_5, window_bounds = array<i64: 1, 1, 8>}, {transform_indices = @transform_6, window_bounds = array<i64: 1, 32, 8>}, {transform_indices = @transform_7, window_bounds = array<i64: 1, 1, 8>}, {transform_indices = @transform_8, window_bounds = array<i64: 1, 8, 32>}, {pipeline_mode = #tpu.pipeline_mode<synchronous>, transform_indices = @transform_9, window_bounds = array<i64: 1, 32>}, {transform_indices = @transform_10, window_bounds = array<i64: 1, 8, 32>}]} {
    %c0 = arith.constant 0 : index
    %c0_0 = arith.constant 0 : index
    %c0_1 = arith.constant 0 : index
    %0 = vector.load %arg3[%c0, %c0_0, %c0_1] : memref<1x8x32xbf16, #tpu.memory_space<vmem>>, vector<1x8x32xbf16>
    %1 = vector.shape_cast %0 : vector<1x8x32xbf16> to vector<8x32xbf16>
    %c0_2 = arith.constant 0 : index
    %c0_3 = arith.constant 0 : index
    %c0_4 = arith.constant 0 : index
    %2 = vector.load %arg4[%c0_2, %c0_3, %c0_4] : memref<1x8x32xbf16, #tpu.memory_space<vmem>>, vector<1x8x32xbf16>
    %3 = vector.shape_cast %2 : vector<1x8x32xbf16> to vector<8x32xbf16>
    %c0_5 = arith.constant 0 : index
    %c0_6 = arith.constant 0 : index
    %c0_7 = arith.constant 0 : index
    %4 = vector.load %arg5[%c0_5, %c0_6, %c0_7] : memref<1x32x8xbf16, #tpu.memory_space<vmem>>, vector<1x32x8xbf16>
    %5 = vector.shape_cast %4 : vector<1x32x8xbf16> to vector<32x8xbf16>
    %cst = arith.constant dense<0.000000e+00> : vector<8x8xf32>
    %6 = tpu.matmul %1, %5, %cst {dimension_numbers = #tpu.dot_dimension_numbers<[1], [0], [0], [1], [0, 0, 1, 1], [], []>} : vector<8x32xbf16>, vector<32x8xbf16>, vector<8x8xf32> -> vector<8x8xf32>
    %c0_8 = arith.constant 0 : index
    %c0_9 = arith.constant 0 : index
    %c0_10 = arith.constant 0 : index
    %7 = vector.load %arg6[%c0_8, %c0_9, %c0_10] : memref<1x1x8xf32, #tpu.memory_space<vmem>>, vector<1x1x8xf32>
    %8 = vector.shape_cast %7 : vector<1x1x8xf32> to vector<1x8xf32>
    %9 = vector.broadcast %8 : vector<1x8xf32> to vector<8x8xf32>
    %10 = arith.addf %6, %9 : vector<8x8xf32>
    %c0_11 = arith.constant 0 : index
    %c0_12 = arith.constant 0 : index
    %c0_13 = arith.constant 0 : index
    %11 = vector.load %arg7[%c0_11, %c0_12, %c0_13] : memref<1x32x8xbf16, #tpu.memory_space<vmem>>, vector<1x32x8xbf16>
    %12 = vector.shape_cast %11 : vector<1x32x8xbf16> to vector<32x8xbf16>
    %cst_14 = arith.constant dense<0.000000e+00> : vector<8x8xf32>
    %13 = tpu.matmul %3, %12, %cst_14 {dimension_numbers = #tpu.dot_dimension_numbers<[1], [0], [0], [1], [0, 0, 1, 1], [], []>} : vector<8x32xbf16>, vector<32x8xbf16>, vector<8x8xf32> -> vector<8x8xf32>
    %c0_15 = arith.constant 0 : index
    %c0_16 = arith.constant 0 : index
    %c0_17 = arith.constant 0 : index
    %14 = vector.load %arg8[%c0_15, %c0_16, %c0_17] : memref<1x1x8xf32, #tpu.memory_space<vmem>>, vector<1x1x8xf32>
    %15 = vector.shape_cast %14 : vector<1x1x8xf32> to vector<1x8xf32>
    %16 = vector.broadcast %15 : vector<1x8xf32> to vector<8x8xf32>
    %17 = arith.addf %13, %16 : vector<8x8xf32>
    %c0_18 = arith.constant 0 : index
    %c0_19 = arith.constant 0 : index
    %c0_20 = arith.constant 0 : index
    %18 = vector.load %arg9[%c0_18, %c0_19, %c0_20] : memref<1x32x8xbf16, #tpu.memory_space<vmem>>, vector<1x32x8xbf16>
    %19 = vector.shape_cast %18 : vector<1x32x8xbf16> to vector<32x8xbf16>
    %cst_21 = arith.constant dense<0.000000e+00> : vector<8x8xf32>
    %20 = tpu.matmul %3, %19, %cst_21 {dimension_numbers = #tpu.dot_dimension_numbers<[1], [0], [0], [1], [0, 0, 1, 1], [], []>} : vector<8x32xbf16>, vector<32x8xbf16>, vector<8x8xf32> -> vector<8x8xf32>
    %c0_22 = arith.constant 0 : index
    %c0_23 = arith.constant 0 : index
    %c0_24 = arith.constant 0 : index
    %21 = vector.load %arg10[%c0_22, %c0_23, %c0_24] : memref<1x1x8xf32, #tpu.memory_space<vmem>>, vector<1x1x8xf32>
    %22 = vector.shape_cast %21 : vector<1x1x8xf32> to vector<1x8xf32>
    %23 = vector.broadcast %22 : vector<1x8xf32> to vector<8x8xf32>
    %24 = arith.addf %20, %23 : vector<8x8xf32>
    %25 = arith.truncf %10 : vector<8x8xf32> to vector<8x8xbf16>
    %26 = arith.truncf %17 : vector<8x8xf32> to vector<8x8xbf16>
    %27 = tpu.transpose %26, [1, 0] : vector<8x8xbf16> -> vector<8x8xbf16>
    %cst_25 = arith.constant dense<0.000000e+00> : vector<8x8xf32>
    %28 = tpu.matmul %25, %27, %cst_25 {dimension_numbers = #tpu.dot_dimension_numbers<[1], [0], [0], [1], [0, 0, 1, 1], [], []>} : vector<8x8xbf16>, vector<8x8xbf16>, vector<8x8xf32> -> vector<8x8xf32>
    %cst_26 = arith.constant dense<0xFF800000> : vector<8xf32>
    %29 = vector.multi_reduction <maximumf>, %28, %cst_26 [1] : vector<8x8xf32> to vector<8xf32>
    %30 = vector.shape_cast %29 : vector<8xf32> to vector<8x1xf32>
    %31 = vector.broadcast %30 : vector<8x1xf32> to vector<8x8xf32>
    %32 = arith.subf %28, %31 : vector<8x8xf32>
    %33 = math.exp %32 : vector<8x8xf32>
    %cst_27 = arith.constant dense<0.000000e+00> : vector<8xf32>
    %34 = vector.multi_reduction <add>, %33, %cst_27 [1] : vector<8x8xf32> to vector<8xf32>
    %35 = vector.shape_cast %34 : vector<8xf32> to vector<8x1xf32>
    %36 = tpu.reciprocal %35 {approx = true} : vector<8x1xf32> -> vector<8x1xf32>
    %37 = vector.broadcast %36 : vector<8x1xf32> to vector<8x8xf32>
    %38 = arith.mulf %33, %37 : vector<8x8xf32>
    %39 = arith.truncf %38 : vector<8x8xf32> to vector<8x8xbf16>
    %40 = arith.truncf %24 : vector<8x8xf32> to vector<8x8xbf16>
    %cst_28 = arith.constant dense<0.000000e+00> : vector<8x8xf32>
    %41 = tpu.matmul %39, %40, %cst_28 {dimension_numbers = #tpu.dot_dimension_numbers<[1], [0], [0], [1], [0, 0, 1, 1], [], []>} : vector<8x8xbf16>, vector<8x8xbf16>, vector<8x8xf32> -> vector<8x8xf32>
    %42 = arith.truncf %41 : vector<8x8xf32> to vector<8x8xbf16>
    %c0_29 = arith.constant 0 : index
    %c0_30 = arith.constant 0 : index
    %c0_31 = arith.constant 0 : index
    %43 = vector.load %arg11[%c0_29, %c0_30, %c0_31] : memref<1x8x32xbf16, #tpu.memory_space<vmem>>, vector<1x8x32xbf16>
    %44 = vector.shape_cast %43 : vector<1x8x32xbf16> to vector<8x32xbf16>
    %cst_32 = arith.constant dense<0.000000e+00> : vector<8x32xf32>
    %45 = tpu.matmul %42, %44, %cst_32 {dimension_numbers = #tpu.dot_dimension_numbers<[1], [0], [0], [1], [0, 0, 1, 1], [], []>} : vector<8x8xbf16>, vector<8x32xbf16>, vector<8x32xf32> -> vector<8x32xf32>
    %c0_i32 = arith.constant 0 : i32
    %46 = arith.cmpi eq, %arg2, %c0_i32 : i32
    %47 = arith.extui %46 : i1 to i32
    %c0_i32_33 = arith.constant 0 : i32
    %48 = arith.cmpi ne, %47, %c0_i32_33 : i32
    scf.if %48 {
      %c0_36 = arith.constant 0 : index
      %c0_37 = arith.constant 0 : index
      %52 = vector.load %arg12[%c0_36, %c0_37] : memref<1x32xf32, #tpu.memory_space<vmem>>, vector<1x32xf32>
      %53 = vector.broadcast %52 : vector<1x32xf32> to vector<8x32xf32>
      %54 = arith.addf %45, %53 : vector<8x32xf32>
      %c0_38 = arith.constant 0 : index
      %c0_39 = arith.constant 0 : index
      %c0_40 = arith.constant 0 : index
      %55 = vector.load %arg13[%c0_38, %c0_39, %c0_40] : memref<1x8x32xf32, #tpu.memory_space<vmem>>, vector<1x8x32xf32>
      %56 = vector.shape_cast %55 : vector<1x8x32xf32> to vector<8x32xf32>
      %57 = vector.shape_cast %54 : vector<8x32xf32> to vector<1x8x32xf32>
      tpu.vector_store %arg13[%c0_38, %c0_39, %c0_40], %57 {strides = array<i32>} : memref<1x8x32xf32, #tpu.memory_space<vmem>>, vector<1x8x32xf32>,
    } else {
    }
    %c0_i32_34 = arith.constant 0 : i32
    %49 = arith.cmpi sgt, %arg2, %c0_i32_34 : i32
    %50 = arith.extui %49 : i1 to i32
    %c0_i32_35 = arith.constant 0 : i32
    %51 = arith.cmpi ne, %50, %c0_i32_35 : i32
    scf.if %51 {
      %c0_36 = arith.constant 0 : index
      %c0_37 = arith.constant 0 : index
      %c0_38 = arith.constant 0 : index
      %52 = vector.load %arg13[%c0_36, %c0_37, %c0_38] : memref<1x8x32xf32, #tpu.memory_space<vmem>>, vector<1x8x32xf32>
      %53 = vector.shape_cast %52 : vector<1x8x32xf32> to vector<8x32xf32>
      %54 = arith.addf %53, %45 : vector<8x32xf32>
      %c0_39 = arith.constant 0 : index
      %c0_40 = arith.constant 0 : index
      %c0_41 = arith.constant 0 : index
      %55 = vector.load %arg13[%c0_39, %c0_40, %c0_41] : memref<1x8x32xf32, #tpu.memory_space<vmem>>, vector<1x8x32xf32>
      %56 = vector.shape_cast %55 : vector<1x8x32xf32> to vector<8x32xf32>
      %57 = vector.shape_cast %54 : vector<8x32xf32> to vector<1x8x32xf32>
      tpu.vector_store %arg13[%c0_39, %c0_40, %c0_41], %57 {strides = array<i32>} : memref<1x8x32xf32, #tpu.memory_space<vmem>>, vector<1x8x32xf32>,
    } else {
    }
    return
  }
  func.func @transform_0(%arg0: i32, %arg1: i32, %arg2: i32) -> (i32, i32, i32) {
    %c0_i32 = arith.constant 0 : i32
    %c0_i32_0 = arith.constant 0 : i32
    return %arg0, %arg1, %c0_i32 : i32, i32, i32
  }
  func.func @transform_1(%arg0: i32, %arg1: i32, %arg2: i32) -> (i32, i32, i32) {
    %c0_i32 = arith.constant 0 : i32
    %c0_i32_0 = arith.constant 0 : i32
    %c0_i32_1 = arith.constant 0 : i32
    return %arg0, %c0_i32, %c0_i32_0 : i32, i32, i32
  }
  func.func @transform_2(%arg0: i32, %arg1: i32, %arg2: i32) -> (i32, i32, i32) {
    %c0_i32 = arith.constant 0 : i32
    %c0_i32_0 = arith.constant 0 : i32
    %c0_i32_1 = arith.constant 0 : i32
    return %arg2, %c0_i32, %c0_i32_0 : i32, i32, i32
  }
  func.func @transform_3(%arg0: i32, %arg1: i32, %arg2: i32) -> (i32, i32, i32) {
    %c0_i32 = arith.constant 0 : i32
    %c0_i32_0 = arith.constant 0 : i32
    %c0_i32_1 = arith.constant 0 : i32
    return %arg2, %c0_i32, %c0_i32_0 : i32, i32, i32
  }
  func.func @transform_4(%arg0: i32, %arg1: i32, %arg2: i32) -> (i32, i32, i32) {
    %c0_i32 = arith.constant 0 : i32
    %c0_i32_0 = arith.constant 0 : i32
    %c0_i32_1 = arith.constant 0 : i32
    return %arg2, %c0_i32, %c0_i32_0 : i32, i32, i32
  }
  func.func @transform_5(%arg0: i32, %arg1: i32, %arg2: i32) -> (i32, i32, i32) {
    %c0_i32 = arith.constant 0 : i32
    %c0_i32_0 = arith.constant 0 : i32
    %c0_i32_1 = arith.constant 0 : i32
    return %arg2, %c0_i32, %c0_i32_0 : i32, i32, i32
  }
  func.func @transform_6(%arg0: i32, %arg1: i32, %arg2: i32) -> (i32, i32, i32) {
    %c0_i32 = arith.constant 0 : i32
    %c0_i32_0 = arith.constant 0 : i32
    %c0_i32_1 = arith.constant 0 : i32
    return %arg2, %c0_i32, %c0_i32_0 : i32, i32, i32
  }
  func.func @transform_7(%arg0: i32, %arg1: i32, %arg2: i32) -> (i32, i32, i32) {
    %c0_i32 = arith.constant 0 : i32
    %c0_i32_0 = arith.constant 0 : i32
    %c0_i32_1 = arith.constant 0 : i32
    return %arg2, %c0_i32, %c0_i32_0 : i32, i32, i32
  }
  func.func @transform_8(%arg0: i32, %arg1: i32, %arg2: i32) -> (i32, i32, i32) {
    %c0_i32 = arith.constant 0 : i32
    %c0_i32_0 = arith.constant 0 : i32
    %c0_i32_1 = arith.constant 0 : i32
    return %arg2, %c0_i32, %c0_i32_0 : i32, i32, i32
  }
  func.func @transform_9(%arg0: i32, %arg1: i32, %arg2: i32) -> (i32, i32) {
    %c0_i32 = arith.constant 0 : i32
    %c0_i32_0 = arith.constant 0 : i32
    %c0_i32_1 = arith.constant 0 : i32
    return %c0_i32, %c0_i32_0 : i32, i32
  }
  func.func @transform_10(%arg0: i32, %arg1: i32, %arg2: i32) -> (i32, i32, i32) {
    %c0_i32 = arith.constant 0 : i32
    %c0_i32_0 = arith.constant 0 : i32
    return %arg0, %arg1, %c0_i32 : i32, i32, i32
  }
}

</mosaic_0001>

<llo_original>
// kernel: tpu_custom_call.1
$region0: #{tpu_custom_call.1}
  #allocation0 [shape = 'u32[]', space=smem, size = 0x4, offset = 0x4, fixed_abs, tag = 'smem constant byte address 0x4 - core index']
  #allocation1 [shape = 'u32[144,128]{1,0:T(1,128)}', space=vmem, size = 0x12000, scoped, tag = 'internal scratch']
  %s0 = inlined_call_operand.vmem [shape: bf16[2,8,32], index: 0, kind: input, shape index: {}]
  %s1 = inlined_call_operand.vmem [shape: bf16[2,8,32], index: 1, kind: input, shape index: {}]
  %s2 = inlined_call_operand.vmem [shape: bf16[4,32,8], index: 2, kind: input, shape index: {}]
  %s3 = inlined_call_operand.vmem [shape: f32[4,1,8], index: 3, kind: input, shape index: {}]
  %s4 = inlined_call_operand.vmem [shape: bf16[4,32,8], index: 4, kind: input, shape index: {}]
  %s5 = inlined_call_operand.vmem [shape: f32[4,1,8], index: 5, kind: input, shape index: {}]
  %s6 = inlined_call_operand.vmem [shape: bf16[4,32,8], index: 6, kind: input, shape index: {}]
  %s7 = inlined_call_operand.vmem [shape: f32[4,1,8], index: 7, kind: input, shape index: {}]
  %s8 = inlined_call_operand.vmem [shape: bf16[4,8,32], index: 8, kind: input, shape index: {}]
  %s9 = inlined_call_operand.vmem [shape: f32[1,32], index: 9, kind: input, shape index: {}]
  %s10 = inlined_call_operand.hbm [shape: f32[2,8,32], index: 10, kind: output, shape index: {}]
  %s11 = sld [smem:[#allocation0]]
  $region81: #{tpu_custom_call.1} parent=0
    _
  %s13 = ssub.s32 1, %s11
  %s14 = scalar_select 0, %s13, %s11
  $region1: #{tpu_custom_call.1} parent=0
    #allocation2 [shape = 'u8[8192]{0}', space=vmem, size = 0x2000, scoped, tag = 'output window, operand 0']
    #allocation3 [shape = 's32[2]{0}', space=sflag, size = 0x8, scoped, tag = 'scoped memory for tpu_custom_call.1']
    %15 = vsyncpa [#allocation3], 0
    %s16 = scalar_lea.sflag [#allocation3], 1
    %17 = vsyncpa %s16, 0
    loop: start=0, step=1, limit=10
    $region2: #{tpu_custom_call.1} parent=1 // loop_pre_header
      _
    $region3: #{tpu_custom_call.1} parent=1 // loop_header
      %s19 = sphi 0, %s23
      %p20 = scmp.ge.s32.totalorder %s19, 10
      %s26 = sphi 0, %s45
      %s27 = sphi 0, %s41
      %s28 = sphi 0, %s37
      %s29 = sphi 0, %s26
      %s30 = sphi 0, %s27
      %s31 = sphi 0, %s28
      %s32 = sphi 0, %s29
      %s33 = sphi 0, %s30
      %s34 = sphi 0, %s31
      %s50 = sphi 0, %s52
      %s53 = sphi 0, %s50
      %s54 = sphi 0, %s53
      %s70 = sphi 0, %s54
      %s76 = sphi 0, %s78
      %s79 = sphi 0, %s76
      %s80 = sphi 0, %s79
      %s96 = sphi 0, %s80
      %s102 = sphi 0, %s104
      %s105 = sphi 0, %s102
      %s106 = sphi 0, %s105
      %s122 = sphi 0, %s106
      %s128 = sphi 0, %s130
      %s131 = sphi 0, %s128
      %s132 = sphi 0, %s131
      %s148 = sphi 0, %s132
      %s154 = sphi 0, %s156
      %s157 = sphi 0, %s154
      %s158 = sphi 0, %s157
      %s174 = sphi 0, %s158
      %s180 = sphi 0, %s182
      %s183 = sphi 0, %s180
      %s184 = sphi 0, %s183
      %s200 = sphi 0, %s184
      %s206 = sphi 0, %s208
      %s209 = sphi 0, %s206
      %s210 = sphi 0, %s209
      %s226 = sphi 0, %s210
      %s232 = sphi 0, %s234
      %s235 = sphi 0, %s232
      %s236 = sphi 0, %s235
      %s252 = sphi 0, %s236
      %s258 = sphi 0, %s260
      %s261 = sphi 0, %s258
      %s262 = sphi 0, %s261
      %s278 = sphi 0, %s262
      %s282 = sphi 0, %s282
      %s284 = sphi 0, %s282
      %s285 = sphi 0, %s284
      %s299 = sphi 0, %s285
      %s307 = sphi 0, %s309
      %s310 = sphi 0, %s307
      %s311 = sphi 0, %s310
      %s327 = sphi 0, %s311
    $region4: #{tpu_custom_call.1} parent=1 // loop_header_branch
      %22 = sbr.rel (%p20) target = $region8
    $region5: #{tpu_custom_call.1} parent=1 // loop_body
      %s24 = ssub.s32 %s19, 1
      %s25 = ssub.s32 %s19, 2
      %s35 = sadd.s32 1, %s28
      %p36 = scmp.ge.s32.totalorder %s35, 4
      %s37 = scalar_select %p36, 0, %s35
      %s38 = sadd.s32 1, %s27
      %s39 = scalar_select %p36, %s38, %s27
      %p40 = scmp.ge.s32.totalorder %s39, 1
      %s41 = scalar_select %p40, 0, %s39
      %s42 = sadd.s32 1, %s26
      %s43 = scalar_select %p40, %s42, %s26
      %p44 = scmp.ge.s32.totalorder %s43, 2
      %s45 = scalar_select %p44, 0, %s43
      %s46 = ssub.s32 %s26, %s45
      %s47 = ssub.s32 %s27, %s41
      %s48 = sor.u32 %s46, %s47
      %p49 = scmp.eq.s32.totalorder %s48, 0
      %s51 = sadd.s32 %s50, 1
      %s52 = scalar_select %p49, %s50, %s51
      %p55 = pneg %p49
      %p56 = scmp.eq.s32.totalorder %s19, 7
      %p57 = por %p55, %p56
      %p58 = scmp.ne.s32.totalorder %s50, %s53
      %p59 = scmp.eq.s32.totalorder %s19, 0
      %p60 = por %p58, %p59
      %p61 = scmp.ne.s32.totalorder %s50, %s53
      %p62 = scmp.eq.s32.totalorder %s24, 7
      %p63 = por %p61, %p62
      %p64 = scmp.ne.s32.totalorder %s53, %s54
      %p65 = scmp.eq.s32.totalorder %s24, 0
      %p66 = por %p64, %p65
      %p67 = scmp.ne.s32.totalorder %s53, %s54
      %p68 = scmp.eq.s32.totalorder %s25, 7
      %p69 = por %p67, %p68
      %p71 = scmp.ne.s32.totalorder %s54, %s70
      %p72 = scmp.eq.s32.totalorder %s25, 0
      %p73 = por %p71, %p72
      %s74 = ssub.s32 %s26, %s45
      %p75 = scmp.eq.s32.totalorder %s74, 0
      %s77 = sadd.s32 %s76, 1
      %s78 = scalar_select %p75, %s76, %s77
      %p81 = pneg %p75
      %p82 = scmp.eq.s32.totalorder %s19, 7
      %p83 = por %p81, %p82
      %p84 = scmp.ne.s32.totalorder %s76, %s79
      %p85 = scmp.eq.s32.totalorder %s19, 0
      %p86 = por %p84, %p85
      %p87 = scmp.ne.s32.totalorder %s76, %s79
      %p88 = scmp.eq.s32.totalorder %s24, 7
      %p89 = por %p87, %p88
      %p90 = scmp.ne.s32.totalorder %s79, %s80
      %p91 = scmp.eq.s32.totalorder %s24, 0
      %p92 = por %p90, %p91
      %p93 = scmp.ne.s32.totalorder %s79, %s80
      %p94 = scmp.eq.s32.totalorder %s25, 7
      %p95 = por %p93, %p94
      %p97 = scmp.ne.s32.totalorder %s80, %s96
      %p98 = scmp.eq.s32.totalorder %s25, 0
      %p99 = por %p97, %p98
      %s100 = ssub.s32 %s28, %s37
      %p101 = scmp.eq.s32.totalorder %s100, 0
      %s103 = sadd.s32 %s102, 1
      %s104 = scalar_select %p101, %s102, %s103
      %p107 = pneg %p101
      %p108 = scmp.eq.s32.totalorder %s19, 7
      %p109 = por %p107, %p108
      %p110 = scmp.ne.s32.totalorder %s102, %s105
      %p111 = scmp.eq.s32.totalorder %s19, 0
      %p112 = por %p110, %p111
      %p113 = scmp.ne.s32.totalorder %s102, %s105
      %p114 = scmp.eq.s32.totalorder %s24, 7
      %p115 = por %p113, %p114
      %p116 = scmp.ne.s32.totalorder %s105, %s106
      %p117 = scmp.eq.s32.totalorder %s24, 0
      %p118 = por %p116, %p117
      %p119 = scmp.ne.s32.totalorder %s105, %s106
      %p120 = scmp.eq.s32.totalorder %s25, 7
      %p121 = por %p119, %p120
      %p123 = scmp.ne.s32.totalorder %s106, %s122
      %p124 = scmp.eq.s32.totalorder %s25, 0
      %p125 = por %p123, %p124
      %s126 = ssub.s32 %s28, %s37
      %p127 = scmp.eq.s32.totalorder %s126, 0
      %s129 = sadd.s32 %s128, 1
      %s130 = scalar_select %p127, %s128, %s129
      %p133 = pneg %p127
      %p134 = scmp.eq.s32.totalorder %s19, 7
      %p135 = por %p133, %p134
      %p136 = scmp.ne.s32.totalorder %s128, %s131
      %p137 = scmp.eq.s32.totalorder %s19, 0
      %p138 = por %p136, %p137
      %p139 = scmp.ne.s32.totalorder %s128, %s131
      %p140 = scmp.eq.s32.totalorder %s24, 7
      %p141 = por %p139, %p140
      %p142 = scmp.ne.s32.totalorder %s131, %s132
      %p143 = scmp.eq.s32.totalorder %s24, 0
      %p144 = por %p142, %p143
      %p145 = scmp.ne.s32.totalorder %s131, %s132
      %p146 = scmp.eq.s32.totalorder %s25, 7
      %p147 = por %p145, %p146
      %p149 = scmp.ne.s32.totalorder %s132, %s148
      %p150 = scmp.eq.s32.totalorder %s25, 0
      %p151 = por %p149, %p150
      %s152 = ssub.s32 %s28, %s37
      %p153 = scmp.eq.s32.totalorder %s152, 0
      %s155 = sadd.s32 %s154, 1
      %s156 = scalar_select %p153, %s154, %s155
      %p159 = pneg %p153
      %p160 = scmp.eq.s32.totalorder %s19, 7
      %p161 = por %p159, %p160
      %p162 = scmp.ne.s32.totalorder %s154, %s157
      %p163 = scmp.eq.s32.totalorder %s19, 0
      %p164 = por %p162, %p163
      %p165 = scmp.ne.s32.totalorder %s154, %s157
      %p166 = scmp.eq.s32.totalorder %s24, 7
      %p167 = por %p165, %p166
      %p168 = scmp.ne.s32.totalorder %s157, %s158
      %p169 = scmp.eq.s32.totalorder %s24, 0
      %p170 = por %p168, %p169
      %p171 = scmp.ne.s32.totalorder %s157, %s158
      %p172 = scmp.eq.s32.totalorder %s25, 7
      %p173 = por %p171, %p172
      %p175 = scmp.ne.s32.totalorder %s158, %s174
      %p176 = scmp.eq.s32.totalorder %s25, 0
      %p177 = por %p175, %p176
      %s178 = ssub.s32 %s28, %s37
      %p179 = scmp.eq.s32.totalorder %s178, 0
      %s181 = sadd.s32 %s180, 1
      %s182 = scalar_select %p179, %s180, %s181
      %p185 = pneg %p179
      %p186 = scmp.eq.s32.totalorder %s19, 7
      %p187 = por %p185, %p186
      %p188 = scmp.ne.s32.totalorder %s180, %s183
      %p189 = scmp.eq.s32.totalorder %s19, 0
      %p190 = por %p188, %p189
      %p191 = scmp.ne.s32.totalorder %s180, %s183
      %p192 = scmp.eq.s32.totalorder %s24, 7
      %p193 = por %p191, %p192
      %p194 = scmp.ne.s32.totalorder %s183, %s184
      %p195 = scmp.eq.s32.totalorder %s24, 0
      %p196 = por %p194, %p195
      %p197 = scmp.ne.s32.totalorder %s183, %s184
      %p198 = scmp.eq.s32.totalorder %s25, 7
      %p199 = por %p197, %p198
      %p201 = scmp.ne.s32.totalorder %s184, %s200
      %p202 = scmp.eq.s32.totalorder %s25, 0
      %p203 = por %p201, %p202
      %s204 = ssub.s32 %s28, %s37
      %p205 = scmp.eq.s32.totalorder %s204, 0
      %s207 = sadd.s32 %s206, 1
      %s208 = scalar_select %p205, %s206, %s207
      %p211 = pneg %p205
      %p212 = scmp.eq.s32.totalorder %s19, 7
      %p213 = por %p211, %p212
      %p214 = scmp.ne.s32.totalorder %s206, %s209
      %p215 = scmp.eq.s32.totalorder %s19, 0
      %p216 = por %p214, %p215
      %p217 = scmp.ne.s32.totalorder %s206, %s209
      %p218 = scmp.eq.s32.totalorder %s24, 7
      %p219 = por %p217, %p218
      %p220 = scmp.ne.s32.totalorder %s209, %s210
      %p221 = scmp.eq.s32.totalorder %s24, 0
      %p222 = por %p220, %p221
      %p223 = scmp.ne.s32.totalorder %s209, %s210
      %p224 = scmp.eq.s32.totalorder %s25, 7
      %p225 = por %p223, %p224
      %p227 = scmp.ne.s32.totalorder %s210, %s226
      %p228 = scmp.eq.s32.totalorder %s25, 0
      %p229 = por %p227, %p228
      %s230 = ssub.s32 %s28, %s37
      %p231 = scmp.eq.s32.totalorder %s230, 0
      %s233 = sadd.s32 %s232, 1
      %s234 = scalar_select %p231, %s232, %s233
      %p237 = pneg %p231
      %p238 = scmp.eq.s32.totalorder %s19, 7
      %p239 = por %p237, %p238
      %p240 = scmp.ne.s32.totalorder %s232, %s235
      %p241 = scmp.eq.s32.totalorder %s19, 0
      %p242 = por %p240, %p241
      %p243 = scmp.ne.s32.totalorder %s232, %s235
      %p244 = scmp.eq.s32.totalorder %s24, 7
      %p245 = por %p243, %p244
      %p246 = scmp.ne.s32.totalorder %s235, %s236
      %p247 = scmp.eq.s32.totalorder %s24, 0
      %p248 = por %p246, %p247
      %p249 = scmp.ne.s32.totalorder %s235, %s236
      %p250 = scmp.eq.s32.totalorder %s25, 7
      %p251 = por %p249, %p250
      %p253 = scmp.ne.s32.totalorder %s236, %s252
      %p254 = scmp.eq.s32.totalorder %s25, 0
      %p255 = por %p253, %p254
      %s256 = ssub.s32 %s28, %s37
      %p257 = scmp.eq.s32.totalorder %s256, 0
      %s259 = sadd.s32 %s258, 1
      %s260 = scalar_select %p257, %s258, %s259
      %p263 = pneg %p257
      %p264 = scmp.eq.s32.totalorder %s19, 7
      %p265 = por %p263, %p264
      %p266 = scmp.ne.s32.totalorder %s258, %s261
      %p267 = scmp.eq.s32.totalorder %s19, 0
      %p268 = por %p266, %p267
      %p269 = scmp.ne.s32.totalorder %s258, %s261
      %p270 = scmp.eq.s32.totalorder %s24, 7
      %p271 = por %p269, %p270
      %p272 = scmp.ne.s32.totalorder %s261, %s262
      %p273 = scmp.eq.s32.totalorder %s24, 0
      %p274 = por %p272, %p273
      %p275 = scmp.ne.s32.totalorder %s261, %s262
      %p276 = scmp.eq.s32.totalorder %s25, 7
      %p277 = por %p275, %p276
      %p279 = scmp.ne.s32.totalorder %s262, %s278
      %p280 = scmp.eq.s32.totalorder %s25, 0
      %p281 = por %p279, %p280
      %s283 = sadd.s32 %s282, 1
      %p286 = scmp.eq.s32.totalorder %s19, 7
      %p287 = scmp.ne.s32.totalorder %s282, %s284
      %p288 = scmp.eq.s32.totalorder %s19, 0
      %p289 = por %p287, %p288
      %p290 = scmp.ne.s32.totalorder %s282, %s284
      %p291 = scmp.eq.s32.totalorder %s24, 7
      %p292 = por %p290, %p291
      %p293 = scmp.ne.s32.totalorder %s284, %s285
      %p294 = scmp.eq.s32.totalorder %s24, 0
      %p295 = por %p293, %p294
      %p296 = scmp.ne.s32.totalorder %s284, %s285
      %p297 = scmp.eq.s32.totalorder %s25, 7
      %p298 = por %p296, %p297
      %p300 = scmp.ne.s32.totalorder %s285, %s299
      %p301 = scmp.eq.s32.totalorder %s25, 0
      %p302 = por %p300, %p301
      %s303 = ssub.s32 %s26, %s45
      %s304 = ssub.s32 %s27, %s41
      %s305 = sor.u32 %s303, %s304
      %p306 = scmp.eq.s32.totalorder %s305, 0
      %s308 = sadd.s32 %s307, 1
      %s309 = scalar_select %p306, %s307, %s308
      %p312 = pneg %p306
      %p313 = scmp.eq.s32.totalorder %s19, 7
      %p314 = por %p312, %p313
      %p315 = scmp.ne.s32.totalorder %s307, %s310
      %p316 = scmp.eq.s32.totalorder %s19, 0
      %p317 = por %p315, %p316
      %p318 = scmp.ne.s32.totalorder %s307, %s310
      %p319 = scmp.eq.s32.totalorder %s24, 7
      %p320 = por %p318, %p319
      %p321 = scmp.ne.s32.totalorder %s310, %s311
      %p322 = scmp.eq.s32.totalorder %s24, 0
      %p323 = por %p321, %p322
      %p324 = scmp.ne.s32.totalorder %s310, %s311
      %p325 = scmp.eq.s32.totalorder %s25, 7
      %p326 = por %p324, %p325
      %p328 = scmp.ne.s32.totalorder %s311, %s327
      %p329 = scmp.eq.s32.totalorder %s25, 0
      %p330 = por %p328, %p329
      %p331 = scmp.le.s32.totalorder 1, %s19
      %p332 = scmp.lt.s32.totalorder %s19, 9
      %p333 = pnand %p331, %p332
      %p334 = pneg %p333
      // Predicated region
      $region9: #{tpu_custom_call.1} parent=5 // pred_check
        _
      $region10: #{tpu_custom_call.1} parent=5 // pred_check_branch
        %336 = sbr.rel (%p333) target = $region12
      $region11: #{tpu_custom_call.1} parent=5 // pred_region
        %s337 = ssub.s32 %s19, 1
        // Predicated region
        $region13: #{tpu_custom_call.1} parent=11 // pred_check
          %p338 = pneg %p295
        $region14: #{tpu_custom_call.1} parent=11 // pred_check_branch
          %340 = sbr.rel (%p338) target = $region16
        $region15: #{tpu_custom_call.1} parent=11 // pred_region
          _
        $region16: #{tpu_custom_call.1} parent=11 // pred_fallthru
          _
      $region12: #{tpu_custom_call.1} parent=5 // pred_fallthru
        _
      %p341 = scmp.lt.s32.totalorder %s19, 8
      // Predicated region
      $region17: #{tpu_custom_call.1} parent=5 // pred_check
        %p342 = pneg %p341
      $region18: #{tpu_custom_call.1} parent=5 // pred_check_branch
        %344 = sbr.rel (%p342) target = $region20
      $region19: #{tpu_custom_call.1} parent=5 // pred_region
        // Predicated region
        $region21: #{tpu_custom_call.1} parent=19 // pred_check
          %p345 = pneg %p60
        $region22: #{tpu_custom_call.1} parent=19 // pred_check_branch
          %347 = sbr.rel (%p345) target = $region24
        $region23: #{tpu_custom_call.1} parent=19 // pred_region
          %p348 = scmp.lt.s32.totalorder %s26, 1
          %s349 = scalar_select %p348, %s26, 1
          %p350 = scmp.lt.s32.totalorder %s27, 0
          %s351 = scalar_select %p350, %s27, 0
          %s352 = sadd.s32 %s351, %s349
          %s353 = smul.addr %s352, 4
          %s354 = scalar_lea.vmem %s0, %s353
        $region24: #{tpu_custom_call.1} parent=19 // pred_fallthru
          _
        // Predicated region
        $region25: #{tpu_custom_call.1} parent=19 // pred_check
          %p355 = pneg %p86
        $region26: #{tpu_custom_call.1} parent=19 // pred_check_branch
          %357 = sbr.rel (%p355) target = $region28
        $region27: #{tpu_custom_call.1} parent=19 // pred_region
          %p358 = scmp.lt.s32.totalorder %s26, 1
          %s359 = scalar_select %p358, %s26, 1
          %s360 = smul.addr %s359, 4
          %s361 = scalar_lea.vmem %s1, %s360
        $region28: #{tpu_custom_call.1} parent=19 // pred_fallthru
          _
        // Predicated region
        $region29: #{tpu_custom_call.1} parent=19 // pred_check
          %p362 = pneg %p112
        $region30: #{tpu_custom_call.1} parent=19 // pred_check_branch
          %364 = sbr.rel (%p362) target = $region32
        $region31: #{tpu_custom_call.1} parent=19 // pred_region
          %p365 = scmp.lt.s32.totalorder %s28, 3
          %s366 = scalar_select %p365, %s28, 3
          %s367 = smul.addr %s366, 4
          %s368 = smul.addr %s367, 4
          %s369 = scalar_lea.vmem %s2, %s368
        $region32: #{tpu_custom_call.1} parent=19 // pred_fallthru
          _
        // Predicated region
        $region33: #{tpu_custom_call.1} parent=19 // pred_check
          %p370 = pneg %p138
        $region34: #{tpu_custom_call.1} parent=19 // pred_check_branch
          %372 = sbr.rel (%p370) target = $region36
        $region35: #{tpu_custom_call.1} parent=19 // pred_region
          %p373 = scmp.lt.s32.totalorder %s28, 3
          %s374 = scalar_select %p373, %s28, 3
          %s375 = scalar_lea.vmem %s3, %s374
        $region36: #{tpu_custom_call.1} parent=19 // pred_fallthru
          _
        // Predicated region
        $region37: #{tpu_custom_call.1} parent=19 // pred_check
          %p376 = pneg %p164
        $region38: #{tpu_custom_call.1} parent=19 // pred_check_branch
          %378 = sbr.rel (%p376) target = $region40
        $region39: #{tpu_custom_call.1} parent=19 // pred_region
          %p379 = scmp.lt.s32.totalorder %s28, 3
          %s380 = scalar_select %p379, %s28, 3
          %s381 = smul.addr %s380, 4
          %s382 = smul.addr %s381, 4
          %s383 = scalar_lea.vmem %s4, %s382
        $region40: #{tpu_custom_call.1} parent=19 // pred_fallthru
          _
        // Predicated region
        $region41: #{tpu_custom_call.1} parent=19 // pred_check
          %p384 = pneg %p190
        $region42: #{tpu_custom_call.1} parent=19 // pred_check_branch
          %386 = sbr.rel (%p384) target = $region44
        $region43: #{tpu_custom_call.1} parent=19 // pred_region
          %p387 = scmp.lt.s32.totalorder %s28, 3
          %s388 = scalar_select %p387, %s28, 3
          %s389 = scalar_lea.vmem %s5, %s388
        $region44: #{tpu_custom_call.1} parent=19 // pred_fallthru
          _
        // Predicated region
        $region45: #{tpu_custom_call.1} parent=19 // pred_check
          %p390 = pneg %p216
        $region46: #{tpu_custom_call.1} parent=19 // pred_check_branch
          %392 = sbr.rel (%p390) target = $region48
        $region47: #{tpu_custom_call.1} parent=19 // pred_region
          %p393 = scmp.lt.s32.totalorder %s28, 3
          %s394 = scalar_select %p393, %s28, 3
          %s395 = smul.addr %s394, 4
          %s396 = smul.addr %s395, 4
          %s397 = scalar_lea.vmem %s6, %s396
        $region48: #{tpu_custom_call.1} parent=19 // pred_fallthru
          _
        // Predicated region
        $region49: #{tpu_custom_call.1} parent=19 // pred_check
          %p398 = pneg %p242
        $region50: #{tpu_custom_call.1} parent=19 // pred_check_branch
          %400 = sbr.rel (%p398) target = $region52
        $region51: #{tpu_custom_call.1} parent=19 // pred_region
          %p401 = scmp.lt.s32.totalorder %s28, 3
          %s402 = scalar_select %p401, %s28, 3
          %s403 = scalar_lea.vmem %s7, %s402
        $region52: #{tpu_custom_call.1} parent=19 // pred_fallthru
          _
        // Predicated region
        $region53: #{tpu_custom_call.1} parent=19 // pred_check
          %p404 = pneg %p268
        $region54: #{tpu_custom_call.1} parent=19 // pred_check_branch
          %406 = sbr.rel (%p404) target = $region56
        $region55: #{tpu_custom_call.1} parent=19 // pred_region
          %p407 = scmp.lt.s32.totalorder %s28, 3
          %s408 = scalar_select %p407, %s28, 3
          %s409 = smul.addr %s408, 4
          %s410 = scalar_lea.vmem %s8, %s409
        $region56: #{tpu_custom_call.1} parent=19 // pred_fallthru
          _
      $region20: #{tpu_custom_call.1} parent=5 // pred_fallthru
        _
      %p411 = scmp.le.s32.totalorder 1, %s19
      %p412 = scmp.lt.s32.totalorder %s19, 9
      %p413 = pnand %p411, %p412
      %p414 = pneg %p413
      // Predicated region
      $region57: #{tpu_custom_call.1} parent=5 // pred_check
        _
      $region58: #{tpu_custom_call.1} parent=5 // pred_check_branch
        %416 = sbr.rel (%p413) target = $region60
      $region59: #{tpu_custom_call.1} parent=5 // pred_region
        %s417 = ssub.s32 %s19, 1
        %p418 = scmp.lt.s32.totalorder %s29, 1
        %s419 = scalar_select %p418, %s29, 1
        %p420 = scmp.lt.s32.totalorder %s30, 0
        %s421 = scalar_select %p420, %s30, 0
        %s422 = sadd.s32 %s421, %s419
        %s423 = smul.addr %s422, 4
        %s424 = scalar_lea.vmem %s0, %s423
        %p425 = pneg %p66
        %p426 = pneg %p63
        %p427 = scmp.lt.s32.totalorder %s29, 1
        %s428 = scalar_select %p427, %s29, 1
        %s429 = smul.addr %s428, 4
        %s430 = scalar_lea.vmem %s1, %s429
        %p431 = pneg %p92
        %p432 = pneg %p89
        %p433 = scmp.lt.s32.totalorder %s31, 3
        %s434 = scalar_select %p433, %s31, 3
        %s435 = smul.addr %s434, 4
        %s436 = smul.addr %s435, 4
        %s437 = scalar_lea.vmem %s2, %s436
        %p438 = pneg %p118
        %p439 = pneg %p115
        %p440 = scmp.lt.s32.totalorder %s31, 3
        %s441 = scalar_select %p440, %s31, 3
        %s442 = scalar_lea.vmem %s3, %s441
        %p443 = pneg %p144
        %p444 = pneg %p141
        %p445 = scmp.lt.s32.totalorder %s31, 3
        %s446 = scalar_select %p445, %s31, 3
        %s447 = smul.addr %s446, 4
        %s448 = smul.addr %s447, 4
        %s449 = scalar_lea.vmem %s4, %s448
        %p450 = pneg %p170
        %p451 = pneg %p167
        %p452 = scmp.lt.s32.totalorder %s31, 3
        %s453 = scalar_select %p452, %s31, 3
        %s454 = scalar_lea.vmem %s5, %s453
        %p455 = pneg %p196
        %p456 = pneg %p193
        %p457 = scmp.lt.s32.totalorder %s31, 3
        %s458 = scalar_select %p457, %s31, 3
        %s459 = smul.addr %s458, 4
        %s460 = smul.addr %s459, 4
        %s461 = scalar_lea.vmem %s6, %s460
        %p462 = pneg %p222
        %p463 = pneg %p219
        %p464 = scmp.lt.s32.totalorder %s31, 3
        %s465 = scalar_select %p464, %s31, 3
        %s466 = scalar_lea.vmem %s7, %s465
        %p467 = pneg %p248
        %p468 = pneg %p245
        %p469 = scmp.lt.s32.totalorder %s31, 3
        %s470 = scalar_select %p469, %s31, 3
        %s471 = smul.addr %s470, 4
        %s472 = scalar_lea.vmem %s8, %s471
        %p473 = pneg %p274
        %p474 = pneg %p271
        %p475 = pneg %p295
        %p476 = pneg %p292
        %p477 = pneg %p323
        %p478 = pneg %p320
        %s479 = sand.u32 %s310, 1
        %s480 = scalar_lea.sflag [#allocation3], %s479
        %s481 = sand.u32 %s310, 1
        %s482 = smul.addr %s481, 8
        %s483 = scalar_lea.vmem [#allocation2], %s482
        %p484 = scmp.lt.s32.totalorder %s29, 1
        %s485 = scalar_select %p484, %s29, 1
        %p486 = scmp.lt.s32.totalorder %s30, 0
        %s487 = scalar_select %p486, %s30, 0
        %s488 = sadd.s32 %s487, %s485
        %s489 = smul.addr %s488, 4
        %s490 = scalar_lea.vmem %s0, %s489
        %p491 = scmp.lt.s32.totalorder %s29, 1
        %s492 = scalar_select %p491, %s29, 1
        %s493 = smul.addr %s492, 4
        %s494 = scalar_lea.vmem %s1, %s493
        %p495 = scmp.lt.s32.totalorder %s31, 3
        %s496 = scalar_select %p495, %s31, 3
        %s497 = smul.addr %s496, 4
        %s498 = smul.addr %s497, 4
        %s499 = scalar_lea.vmem %s2, %s498
        %p500 = scmp.lt.s32.totalorder %s31, 3
        %s501 = scalar_select %p500, %s31, 3
        %s502 = scalar_lea.vmem %s3, %s501
        %p503 = scmp.lt.s32.totalorder %s31, 3
        %s504 = scalar_select %p503, %s31, 3
        %s505 = smul.addr %s504, 4
        %s506 = smul.addr %s505, 4
        %s507 = scalar_lea.vmem %s4, %s506
        %p508 = scmp.lt.s32.totalorder %s31, 3
        %s509 = scalar_select %p508, %s31, 3
        %s510 = scalar_lea.vmem %s5, %s509
        %p511 = scmp.lt.s32.totalorder %s31, 3
        %s512 = scalar_select %p511, %s31, 3
        %s513 = smul.addr %s512, 4
        %s514 = smul.addr %s513, 4
        %s515 = scalar_lea.vmem %s6, %s514
        %p516 = scmp.lt.s32.totalorder %s31, 3
        %s517 = scalar_select %p516, %s31, 3
        %s518 = scalar_lea.vmem %s7, %s517
        %p519 = scmp.lt.s32.totalorder %s31, 3
        %s520 = scalar_select %p519, %s31, 3
        %s521 = smul.addr %s520, 4
        %s522 = scalar_lea.vmem %s8, %s521
        %v524 = vld [vmem:[%s490] sm:$0xf]
        %v525 = vld [vmem:[%s494] sm:$0xf]
        %v526 = vld [vmem:[%s499] sm:$0xf]
        %v527 = vld [vmem:[%s499 + $0x4] sm:$0xf]
        %v528 = vld [vmem:[%s499 + $0x8] sm:$0xf]
        %v529 = vld [vmem:[%s499 + $0xc] sm:$0xf]
        %v530 = vld [vmem:[%s502] sm:$0x1]
        %v532 = vlaneseq
        %v533 = vshrl.u32 %v532, 7
        %v534 = vsub.s32 0, %v533
        %v535 = vrot.slane %v530, %v534
        %v541 = vunpack.c.l.b16 %v526
        %v542 = vunpack.c.l.b16 %v527
        %v543 = vunpack.c.l.b16 %v528
        %v544 = vunpack.c.l.b16 %v529
        %v545 = vpack.c.b16 %v542, %v541
        %v546 = vpack.c.b16 %v544, %v543
        %vm549 = vcmask 261120
        %v551 = vsel %vm549, %v524, 0
        %553 = vmatprep.subr.bf16.mxu0 0
        %554 = vmatpush1.bf16.msra.mxu0 %v545
        %555 = vmatprep.subr.bf16.mxu0 0
        %556 = vmatpush1.bf16.msra.mxu0 %v546
        %557 = vmatprep.subr.bf16.mxu0 0
        %558 = vmatpush1.bf16.msra.mxu0 0
        %559 = vmatprep.subr.bf16.mxu0 0
        %560 = vmatpush1.bf16.msra.mxu0 0
        %561 = vmatprep.subr.bf16.mxu0 0
        %562 = vmatpush1.bf16.msra.mxu0 0
        %563 = vmatprep.subr.bf16.mxu0 0
        %564 = vmatpush1.bf16.msra.mxu0 0
        %565 = vmatprep.subr.bf16.mxu0 0
        %566 = vmatpush1.bf16.msra.mxu0 0
        %567 = vmatprep.subr.bf16.mxu0 0
        %568 = vmatpush1.bf16.msra.mxu0 0
        %569 = vmatprep.subr.bf16.mxu0 0
        %570 = vmatpush1.bf16.msra.mxu0 0
        %571 = vmatprep.subr.bf16.mxu0 0
        %572 = vmatpush1.bf16.msra.mxu0 0
        %573 = vmatprep.subr.bf16.mxu0 0
        %574 = vmatpush1.bf16.msra.mxu0 0
        %575 = vmatprep.subr.bf16.mxu0 0
        %576 = vmatpush1.bf16.msra.mxu0 0
        %577 = vmatprep.subr.bf16.mxu0 0
        %578 = vmatpush1.bf16.msra.mxu0 0
        %579 = vmatprep.subr.bf16.mxu0 0
        %580 = vmatpush1.bf16.msra.mxu0 0
        %581 = vmatprep.subr.bf16.mxu0 0
        %582 = vmatpush1.bf16.msra.mxu0 0
        %583 = vmatprep.subr.bf16.mxu0 0
        %584 = vmatpush1.bf16.msra.mxu0 0
        %585 = vmatprep.mubr.bf16.mxu0 0
        %586 = vmatmul.mubr.bf16.gmra.mrb[0].mxu0 %v551
        %v587 = vpop.f32.mrb[0].mxu0
        %v588 = vadd.f32 %v535, %v587
        %v589 = vpop.f32.mrb[0].mxu0
        %v590 = vpop.f32.mrb[0].mxu0
        %v591 = vpop.f32.mrb[0].mxu0
        %592 = vdwg.mxu0
        %v593 = vld [vmem:[%s507] sm:$0xf]
        %v594 = vld [vmem:[%s507 + $0x4] sm:$0xf]
        %v595 = vld [vmem:[%s507 + $0x8] sm:$0xf]
        %v596 = vld [vmem:[%s507 + $0xc] sm:$0xf]
        %v597 = vld [vmem:[%s510] sm:$0x1]
        %v599 = vlaneseq
        %v600 = vshrl.u32 %v599, 7
        %v601 = vsub.s32 0, %v600
        %v602 = vrot.slane %v597, %v601
        %v608 = vunpack.c.l.b16 %v593
        %v609 = vunpack.c.l.b16 %v594
        %v610 = vunpack.c.l.b16 %v595
        %v611 = vunpack.c.l.b16 %v596
        %v612 = vpack.c.b16 %v609, %v608
        %v613 = vpack.c.b16 %v611, %v610
        %v617 = vsel %vm549, %v525, 0
        %619 = vmatprep.subr.bf16.mxu0 0
        %620 = vmatpush1.bf16.msra.mxu0 %v612
        %621 = vmatprep.subr.bf16.mxu0 0
        %622 = vmatpush1.bf16.msra.mxu0 %v613
        %623 = vmatprep.subr.bf16.mxu0 0
        %624 = vmatpush1.bf16.msra.mxu0 0
        %625 = vmatprep.subr.bf16.mxu0 0
        %626 = vmatpush1.bf16.msra.mxu0 0
        %627 = vmatprep.subr.bf16.mxu0 0
        %628 = vmatpush1.bf16.msra.mxu0 0
        %629 = vmatprep.subr.bf16.mxu0 0
        %630 = vmatpush1.bf16.msra.mxu0 0
        %631 = vmatprep.subr.bf16.mxu0 0
        %632 = vmatpush1.bf16.msra.mxu0 0
        %633 = vmatprep.subr.bf16.mxu0 0
        %634 = vmatpush1.bf16.msra.mxu0 0
        %635 = vmatprep.subr.bf16.mxu0 0
        %636 = vmatpush1.bf16.msra.mxu0 0
        %637 = vmatprep.subr.bf16.mxu0 0
        %638 = vmatpush1.bf16.msra.mxu0 0
        %639 = vmatprep.subr.bf16.mxu0 0
        %640 = vmatpush1.bf16.msra.mxu0 0
        %641 = vmatprep.subr.bf16.mxu0 0
        %642 = vmatpush1.bf16.msra.mxu0 0
        %643 = vmatprep.subr.bf16.mxu0 0
        %644 = vmatpush1.bf16.msra.mxu0 0
        %645 = vmatprep.subr.bf16.mxu0 0
        %646 = vmatpush1.bf16.msra.mxu0 0
        %647 = vmatprep.subr.bf16.mxu0 0
        %648 = vmatpush1.bf16.msra.mxu0 0
        %649 = vmatprep.subr.bf16.mxu0 0
        %650 = vmatpush1.bf16.msra.mxu0 0
        %651 = vmatprep.mubr.bf16.mxu0 0
        %652 = vmatmul.mubr.bf16.gmra.mrb[0].mxu0 %v617
        %v653 = vpop.f32.mrb[0].mxu0
        %v654 = vadd.f32 %v602, %v653
        %v655 = vpop.f32.mrb[0].mxu0
        %v656 = vpop.f32.mrb[0].mxu0
        %v657 = vpop.f32.mrb[0].mxu0
        %658 = vdwg.mxu0
        %v659 = vld [vmem:[%s515] sm:$0xf]
        %v660 = vld [vmem:[%s515 + $0x4] sm:$0xf]
        %v661 = vld [vmem:[%s515 + $0x8] sm:$0xf]
        %v662 = vld [vmem:[%s515 + $0xc] sm:$0xf]
        %v663 = vld [vmem:[%s518] sm:$0x1]
        %v665 = vlaneseq
        %v666 = vshrl.u32 %v665, 7
        %v667 = vsub.s32 0, %v666
        %v668 = vrot.slane %v663, %v667
        %v674 = vunpack.c.l.b16 %v659
        %v675 = vunpack.c.l.b16 %v660
        %v676 = vunpack.c.l.b16 %v661
        %v677 = vunpack.c.l.b16 %v662
        %v678 = vpack.c.b16 %v675, %v674
        %v679 = vpack.c.b16 %v677, %v676
        %682 = vmatprep.subr.bf16.mxu0 0
        %683 = vmatpush1.bf16.msra.mxu0 %v678
        %684 = vmatprep.subr.bf16.mxu0 0
        %685 = vmatpush1.bf16.msra.mxu0 %v679
        %686 = vmatprep.subr.bf16.mxu0 0
        %687 = vmatpush1.bf16.msra.mxu0 0
        %688 = vmatprep.subr.bf16.mxu0 0
        %689 = vmatpush1.bf16.msra.mxu0 0
        %690 = vmatprep.subr.bf16.mxu0 0
        %691 = vmatpush1.bf16.msra.mxu0 0
        %692 = vmatprep.subr.bf16.mxu0 0
        %693 = vmatpush1.bf16.msra.mxu0 0
        %694 = vmatprep.subr.bf16.mxu0 0
        %695 = vmatpush1.bf16.msra.mxu0 0
        %696 = vmatprep.subr.bf16.mxu0 0
        %697 = vmatpush1.bf16.msra.mxu0 0
        %698 = vmatprep.subr.bf16.mxu0 0
        %699 = vmatpush1.bf16.msra.mxu0 0
        %700 = vmatprep.subr.bf16.mxu0 0
        %701 = vmatpush1.bf16.msra.mxu0 0
        %702 = vmatprep.subr.bf16.mxu0 0
        %703 = vmatpush1.bf16.msra.mxu0 0
        %704 = vmatprep.subr.bf16.mxu0 0
        %705 = vmatpush1.bf16.msra.mxu0 0
        %706 = vmatprep.subr.bf16.mxu0 0
        %707 = vmatpush1.bf16.msra.mxu0 0
        %708 = vmatprep.subr.bf16.mxu0 0
        %709 = vmatpush1.bf16.msra.mxu0 0
        %710 = vmatprep.subr.bf16.mxu0 0
        %711 = vmatpush1.bf16.msra.mxu0 0
        %712 = vmatprep.subr.bf16.mxu0 0
        %713 = vmatpush1.bf16.msra.mxu0 0
        %714 = vmatprep.mubr.bf16.mxu0 0
        %715 = vmatmul.mubr.bf16.gmra.mrb[0].mxu0 %v617
        %v716 = vpop.f32.mrb[0].mxu0
        %v717 = vadd.f32 %v668, %v716
        %v718 = vpop.f32.mrb[0].mxu0
        %v719 = vpop.f32.mrb[0].mxu0
        %v720 = vpop.f32.mrb[0].mxu0
        %721 = vdwg.mxu0
        %v722 = vpack.c.bf16 %v588, %v588
        %v723 = vpack.c.bf16 %v654, %v654
        %vm724 = vcmask 64512
        %v726 = vsel %vm724, %v722, 0
        %v729 = vsel %vm724, %v723, 0
        %731 = vmatprep.subr.bf16.mxu0 0
        %732 = vmatpush1.bf16.xpose.msra.mxu0 %v729
        %733 = vmatprep.subr.bf16.mxu0 0
        %734 = vmatpush1.bf16.xpose.msra.mxu0 0
        %735 = vmatprep.subr.bf16.mxu0 0
        %736 = vmatpush1.bf16.xpose.msra.mxu0 0
        %737 = vmatprep.subr.bf16.mxu0 0
        %738 = vmatpush1.bf16.xpose.msra.mxu0 0
        %739 = vmatprep.subr.bf16.mxu0 0
        %740 = vmatpush1.bf16.xpose.msra.mxu0 0
        %741 = vmatprep.subr.bf16.mxu0 0
        %742 = vmatpush1.bf16.xpose.msra.mxu0 0
        %743 = vmatprep.subr.bf16.mxu0 0
        %744 = vmatpush1.bf16.xpose.msra.mxu0 0
        %745 = vmatprep.subr.bf16.mxu0 0
        %746 = vmatpush1.bf16.xpose.msra.mxu0 0
        %747 = vmatprep.subr.bf16.mxu0 0
        %748 = vmatpush1.bf16.xpose.msra.mxu0 0
        %749 = vmatprep.subr.bf16.mxu0 0
        %750 = vmatpush1.bf16.xpose.msra.mxu0 0
        %751 = vmatprep.subr.bf16.mxu0 0
        %752 = vmatpush1.bf16.xpose.msra.mxu0 0
        %753 = vmatprep.subr.bf16.mxu0 0
        %754 = vmatpush1.bf16.xpose.msra.mxu0 0
        %755 = vmatprep.subr.bf16.mxu0 0
        %756 = vmatpush1.bf16.xpose.msra.mxu0 0
        %757 = vmatprep.subr.bf16.mxu0 0
        %758 = vmatpush1.bf16.xpose.msra.mxu0 0
        %759 = vmatprep.subr.bf16.mxu0 0
        %760 = vmatpush1.bf16.xpose.msra.mxu0 0
        %761 = vmatprep.subr.bf16.mxu0 0
        %762 = vmatpush1.bf16.xpose.msra.mxu0 0
        %763 = vmatprep.mubr.bf16.mxu0 0
        %764 = vmatmul.mubr.bf16.gmra.mrb[0].mxu0 %v726
        %v765 = vpop.f32.mrb[0].mxu0
        %v766 = vadd.f32 0.0, %v765
        %v767 = vpop.f32.mrb[0].mxu0
        %v768 = vpop.f32.mrb[0].mxu0
        %v769 = vpop.f32.mrb[0].mxu0
        %770 = vdwg.mxu0
        %v771 = vsel %vm724, %v766, -inf
        %772 = vmax.xlane.f32.xlu0 %v771
        %v773 = vpop.xlane.xlu0 %772
        %v774 = vsub.f32 %v766, %v773
        %v775 = vmul.f32 %v774, 1.442695
        %v776 = vpow.pop %v775
        %v777 = vsel %vm724, %v776, 0.0
        %778 = vadd.xlane.f32.xlu0 %v777
        %v779 = vpop.xlane.xlu0 %778
        %v780 = vrcp.pop %v779
        %v781 = vmul.f32 %v776, %v780
        %v782 = vpack.c.bf16 %v781, %v781
        %v783 = vpack.c.bf16 %v717, %v717
        %v785 = vsel %vm724, %v782, 0
        %vm787 = vcmask 1043456
        %v789 = vsel %vm787, %v783, 0
        %791 = vmatprep.subr.bf16.mxu0 0
        %792 = vmatpush1.bf16.msra.mxu0 %v789
        %793 = vmatprep.subr.bf16.mxu0 0
        %794 = vmatpush1.bf16.msra.mxu0 0
        %795 = vmatprep.subr.bf16.mxu0 0
        %796 = vmatpush1.bf16.msra.mxu0 0
        %797 = vmatprep.subr.bf16.mxu0 0
        %798 = vmatpush1.bf16.msra.mxu0 0
        %799 = vmatprep.subr.bf16.mxu0 0
        %800 = vmatpush1.bf16.msra.mxu0 0
        %801 = vmatprep.subr.bf16.mxu0 0
        %802 = vmatpush1.bf16.msra.mxu0 0
        %803 = vmatprep.subr.bf16.mxu0 0
        %804 = vmatpush1.bf16.msra.mxu0 0
        %805 = vmatprep.subr.bf16.mxu0 0
        %806 = vmatpush1.bf16.msra.mxu0 0
        %807 = vmatprep.subr.bf16.mxu0 0
        %808 = vmatpush1.bf16.msra.mxu0 0
        %809 = vmatprep.subr.bf16.mxu0 0
        %810 = vmatpush1.bf16.msra.mxu0 0
        %811 = vmatprep.subr.bf16.mxu0 0
        %812 = vmatpush1.bf16.msra.mxu0 0
        %813 = vmatprep.subr.bf16.mxu0 0
        %814 = vmatpush1.bf16.msra.mxu0 0
        %815 = vmatprep.subr.bf16.mxu0 0
        %816 = vmatpush1.bf16.msra.mxu0 0
        %817 = vmatprep.subr.bf16.mxu0 0
        %818 = vmatpush1.bf16.msra.mxu0 0
        %819 = vmatprep.subr.bf16.mxu0 0
        %820 = vmatpush1.bf16.msra.mxu0 0
        %821 = vmatprep.subr.bf16.mxu0 0
        %822 = vmatpush1.bf16.msra.mxu0 0
        %823 = vmatprep.mubr.bf16.mxu0 0
        %824 = vmatmul.mubr.bf16.gmra.mrb[0].mxu0 %v785
        %v825 = vpop.f32.mrb[0].mxu0
        %v826 = vadd.f32 0.0, %v825
        %v827 = vpop.f32.mrb[0].mxu0
        %v828 = vpop.f32.mrb[0].mxu0
        %v829 = vpop.f32.mrb[0].mxu0
        %830 = vdwg.mxu0
        %v831 = vpack.c.bf16 %v826, %v826
        %v832 = vld [vmem:[%s522] sm:$0xf]
        %v834 = vsel %vm724, %v831, 0
        %v837 = vsel %vm787, %v832, 0
        %839 = vmatprep.subr.bf16.mxu0 0
        %840 = vmatpush1.bf16.msra.mxu0 %v837
        %841 = vmatprep.subr.bf16.mxu0 0
        %842 = vmatpush1.bf16.msra.mxu0 0
        %843 = vmatprep.subr.bf16.mxu0 0
        %844 = vmatpush1.bf16.msra.mxu0 0
        %845 = vmatprep.subr.bf16.mxu0 0
        %846 = vmatpush1.bf16.msra.mxu0 0
        %847 = vmatprep.subr.bf16.mxu0 0
        %848 = vmatpush1.bf16.msra.mxu0 0
        %849 = vmatprep.subr.bf16.mxu0 0
        %850 = vmatpush1.bf16.msra.mxu0 0
        %851 = vmatprep.subr.bf16.mxu0 0
        %852 = vmatpush1.bf16.msra.mxu0 0
        %853 = vmatprep.subr.bf16.mxu0 0
        %854 = vmatpush1.bf16.msra.mxu0 0
        %855 = vmatprep.subr.bf16.mxu0 0
        %856 = vmatpush1.bf16.msra.mxu0 0
        %857 = vmatprep.subr.bf16.mxu0 0
        %858 = vmatpush1.bf16.msra.mxu0 0
        %859 = vmatprep.subr.bf16.mxu0 0
        %860 = vmatpush1.bf16.msra.mxu0 0
        %861 = vmatprep.subr.bf16.mxu0 0
        %862 = vmatpush1.bf16.msra.mxu0 0
        %863 = vmatprep.subr.bf16.mxu0 0
        %864 = vmatpush1.bf16.msra.mxu0 0
        %865 = vmatprep.subr.bf16.mxu0 0
        %866 = vmatpush1.bf16.msra.mxu0 0
        %867 = vmatprep.subr.bf16.mxu0 0
        %868 = vmatpush1.bf16.msra.mxu0 0
        %869 = vmatprep.subr.bf16.mxu0 0
        %870 = vmatpush1.bf16.msra.mxu0 0
        %871 = vmatprep.mubr.bf16.mxu0 0
        %872 = vmatmul.mubr.bf16.gmra.mrb[0].mxu0 %v834
        %v873 = vpop.f32.mrb[0].mxu0
        %v874 = vadd.f32 0.0, %v873
        %v875 = vpop.f32.mrb[0].mxu0
        %v876 = vpop.f32.mrb[0].mxu0
        %v877 = vpop.f32.mrb[0].mxu0
        %878 = vdwg.mxu0
        %p879 = scmp.eq.s32.totalorder %s31, 0
        // Predicated region
        $region61: #{tpu_custom_call.1} parent=59 // pred_check
          %p880 = pneg %p879
        $region62: #{tpu_custom_call.1} parent=59 // pred_check_branch
          %882 = sbr.rel (%p880) target = $region64
        $region63: #{tpu_custom_call.1} parent=59 // pred_region
          %v883 = vld [vmem:[%s9] sm:$0x1]
          %v885 = vlaneseq
          %v886 = vshrl.u32 %v885, 7
          %v887 = vsub.s32 0, %v886
          %v888 = vrot.slane %v883, %v887
          %v890 = vadd.f32 %v874, %v888
          %891 = vst.msk [vmem:[%s483] sm:$0xff] %vm549, %v890
        $region64: #{tpu_custom_call.1} parent=59 // pred_fallthru
          _
        %p892 = scmp.gt.s32.totalorder %s31, 0
        // Predicated region
        $region65: #{tpu_custom_call.1} parent=59 // pred_check
          %p893 = pneg %p892
        $region66: #{tpu_custom_call.1} parent=59 // pred_check_branch
          %895 = sbr.rel (%p893) target = $region68
        $region67: #{tpu_custom_call.1} parent=59 // pred_region
          %v896 = vld [vmem:[%s483] sm:$0xff]
          %v897 = vadd.f32 %v896, %v874
          %898 = vst.msk [vmem:[%s483] sm:$0xff] %vm549, %v897
        $region68: #{tpu_custom_call.1} parent=59 // pred_fallthru
          _
        %s899 = sand.u32 %s310, 1
        %s900 = scalar_lea.sflag [#allocation3], %s899
        %s901 = sand.u32 %s310, 1
        %s902 = smul.addr %s901, 8
        %s903 = scalar_lea.vmem [#allocation2], %s902
        // Predicated region
        $region69: #{tpu_custom_call.1} parent=59 // pred_check
          %p904 = pneg %p320
        $region70: #{tpu_custom_call.1} parent=59 // pred_check_branch
          %906 = sbr.rel (%p904) target = $region72
        $region71: #{tpu_custom_call.1} parent=59 // pred_region
          %s908 = ssub.s32 128, 128
          %909 = vsyncadd %s900, %s908
          %s910 = sadd.s32 %s30, %s29
          %s911 = smul.addr %s910, 128
          %s912 = scalar_lea.hbm %s10, %s911
          %s914 = sshll.u32 %s903, 4
          %s915 = int_to_ptr.vmem [resolvable:$true] %s914
          %917 = dma.vmem_to_hbm [thread:$0]  %s915, 128, %s912, %s900
        $region72: #{tpu_custom_call.1} parent=59 // pred_fallthru
          _
      $region60: #{tpu_custom_call.1} parent=5 // pred_fallthru
        _
      %p918 = scmp.le.s32.totalorder 2, %s19
      // Predicated region
      $region73: #{tpu_custom_call.1} parent=5 // pred_check
        %p919 = pneg %p918
      $region74: #{tpu_custom_call.1} parent=5 // pred_check_branch
        %921 = sbr.rel (%p919) target = $region76
      $region75: #{tpu_custom_call.1} parent=5 // pred_region
        %s922 = ssub.s32 %s19, 2
        // Predicated region
        $region77: #{tpu_custom_call.1} parent=75 // pred_check
          %p923 = pneg %p326
        $region78: #{tpu_custom_call.1} parent=75 // pred_check_branch
          %925 = sbr.rel (%p923) target = $region80
        $region79: #{tpu_custom_call.1} parent=75 // pred_region
          %s926 = sand.u32 %s311, 1
          %s927 = scalar_lea.sflag [#allocation3], %s926
          %s928 = sand.u32 %s311, 1
          %s929 = smul.addr %s928, 8
          %s930 = scalar_lea.vmem [#allocation2], %s929
          %931 = dma.done %s927, 128
        $region80: #{tpu_custom_call.1} parent=75 // pred_fallthru
          _
      $region76: #{tpu_custom_call.1} parent=5 // pred_fallthru
        _
    $region6: #{tpu_custom_call.1} parent=1 // loop_footer
      %s23 = sadd.s32 1, %s19
    $region7: #{tpu_custom_call.1} parent=1 // loop_footer_branch
      %18 = sbr.rel target = $region3
    $region8: #{tpu_custom_call.1} parent=1 // loop_exit
      _
    %932 = vsyncpa [#allocation3], 1
    %s933 = scalar_lea.sflag [#allocation3], 1
    %934 = vsyncpa %s933, 1

</llo_original>
